<compile_context>
chip_gen: v5e
topology: v5e:2x2
jax: 0.10.0
libtpu: 0.0.40
codegen_flags: <defaults>
</compile_context>

<pallas_src>
import jax
import jax.numpy as jnp
from jax.experimental import pallas as pl
from jax.experimental.pallas import tpu as pltpu


def _mul_mask_kernel(mask_ref, x_ref, o_ref):
    # mask_ref is either (TR, 1) (per-row, broadcast across lanes) or
    # (TR, TL) (element-wise); jnp broadcasting handles both.  The 1/(1-p)
    # scale is already folded into the mask, so this is a single VPU multiply.
    o_ref[...] = x_ref[...] * mask_ref[...]


_MAX_BLOCK_BYTES = 2 * 1024 * 1024  # per-operand block cap (fits default scoped VMEM)


def _pick_tile(dim, unit, max_tile):
    """Block size along one axis: full dim if small enough, else a multiple of `unit`."""
    if dim <= max_tile:
        return dim
    return max(unit, (max_tile // unit) * unit)


def _dropout_2d(x2, mask2, mask_is_row):
    """Tiled, pipelined x2 * mask2 over a (rows, lanes) slab."""
    rows, lanes = x2.shape
    itemsize = jnp.dtype(x2.dtype).itemsize
    row_unit = 8 if itemsize >= 4 else (16 if itemsize == 2 else 32)

    tl = _pick_tile(lanes, 128, 2048)
    max_rows = max(row_unit,
                   (_MAX_BLOCK_BYTES // (tl * itemsize)) // row_unit * row_unit)
    tr = _pick_tile(rows, row_unit, max_rows)

    grid = (pl.cdiv(rows, tr), pl.cdiv(lanes, tl))

    if mask_is_row:
        mask_spec = pl.BlockSpec((tr, 1), lambda i, j: (i, 0))
    else:
        mask_spec = pl.BlockSpec((tr, tl), lambda i, j: (i, j))

    return pl.pallas_call(
        _mul_mask_kernel,
        out_shape=jax.ShapeDtypeStruct(x2.shape, x2.dtype),
        grid=grid,
        in_specs=[mask_spec,
                  pl.BlockSpec((tr, tl), lambda i, j: (i, j))],
        out_specs=pl.BlockSpec((tr, tl), lambda i, j: (i, j)),
        compiler_params=pltpu.CompilerParams(
            dimension_semantics=("parallel", "parallel")),
    )(mask2, x2)


def bernoulli_dropout(x, p, seed):
    """Pallas implementation of BernoulliDropout.forward."""
    p = float(p)
    if p <= 0.0:
        return x
    if p >= 1.0:
        # multiplier == 0.0 -> result is identically zero; skip PRNG + kernel.
        return jnp.zeros_like(x)

    keep_prob = 1.0 - p
    multiplier = 1.0 / (1.0 - p)
    key = jax.random.PRNGKey(seed)

    if x.ndim <= 2:
        # Element-wise mask path (rank <= 2 in the PyTorch module).
        x2 = x.reshape(1, -1) if x.ndim <= 1 else x
        keep = jax.random.bernoulli(key, keep_prob, x2.shape)
        mask2 = jnp.where(keep, multiplier, 0.0).astype(x2.dtype)
        out2 = _dropout_2d(x2, mask2, mask_is_row=False)
        return out2.reshape(x.shape)

    assert x.ndim == 4, "channel-mask path expects 4D NCHW input"
    N, C, H, W = x.shape
    # Lane-dense layout: rows = N*C (one mask value per row), lanes = H*W.
    x2 = x.reshape(N * C, H * W)
    keep = jax.random.bernoulli(key, keep_prob, (N * C, 1))
    mask2 = jnp.where(keep, multiplier, 0.0).astype(x.dtype)
    out2 = _dropout_2d(x2, mask2, mask_is_row=True)
    return out2.reshape(N, C, H, W)


if __name__ == "__main__":
    key = jax.random.PRNGKey(0)
    N, C, H, W = 2, 4, 16, 16
    x = jax.random.normal(key, (N, C, H, W), dtype=jnp.float32)

    p = 0.3
    out = jax.block_until_ready(bernoulli_dropout(x, p, seed=1234))

    mult = 1.0 / (1.0 - p)
    out_np = jax.device_get(out)
    x_np = jax.device_get(x)
    ok = out_np.shape == x_np.shape

    # Each (n, c) slice is either all-zero or exactly x * 1/(1-p).
    for n in range(N):
        for c in range(C):
            o_slice = out_np[n, c]
            x_slice = x_np[n, c]
            zero = (abs(o_slice) < 1e-6).all()
            scaled = (abs(o_slice - x_slice * mult) < 1e-4).all()
            ok = ok and bool(zero or scaled)

    # p <= 0 -> identity; p >= 1 -> zeros.
    ident = jax.block_until_ready(bernoulli_dropout(x, 0.0, seed=0))
    ok = ok and bool(jnp.allclose(ident, x))
    zeros = jax.block_until_ready(bernoulli_dropout(x, 1.0, seed=0))
    ok = ok and bool(jnp.all(zeros == 0))

    # rank-2 (element-wise mask) path: every element is 0 or x * 1/(1-p).
    x2d = jax.random.normal(jax.random.PRNGKey(1), (8, 32), dtype=jnp.float32)
    out2d = jax.block_until_ready(bernoulli_dropout(x2d, p, seed=7))
    o2 = jax.device_get(out2d)
    xr = jax.device_get(x2d)
    elem_ok = ((abs(o2) < 1e-6) | (abs(o2 - xr * mult) < 1e-4)).all()
    ok = ok and bool(elem_ok)

    if ok:
        print("KERNEL_OK")
    else:
        raise SystemExit("mismatch vs reference semantics")
</pallas_src>

<mosaic_0001>
module attributes {stable_mosaic.version = 11 : i64} {
  func.func @_mul_mask_kernel(%arg0: i32, %arg1: i32, %arg2: memref<8x1xf32, #tpu.memory_space<vmem>>, %arg3: memref<8x256xf32, #tpu.memory_space<vmem>>, %arg4: memref<8x256xf32, #tpu.memory_space<vmem>>) attributes {dimension_semantics = [#tpu.dimension_semantics<parallel>, #tpu.dimension_semantics<parallel>], iteration_bounds = array<i64: 1, 1>, scalar_prefetch = 0 : i64, scratch_operands = 0 : i64, tpu.core_type = #tpu.core_type<tc>, window_params = [{transform_indices = @transform_0, window_bounds = array<i64: 8, 1>}, {transform_indices = @transform_1, window_bounds = array<i64: 8, 256>}, {transform_indices = @transform_2, window_bounds = array<i64: 8, 256>}]} {
    %c0 = arith.constant 0 : index
    %c0_0 = arith.constant 0 : index
    %0 = vector.load %arg3[%c0, %c0_0] : memref<8x256xf32, #tpu.memory_space<vmem>>, vector<8x256xf32>
    %c0_1 = arith.constant 0 : index
    %c0_2 = arith.constant 0 : index
    %1 = vector.load %arg2[%c0_1, %c0_2] : memref<8x1xf32, #tpu.memory_space<vmem>>, vector<8x1xf32>
    %2 = vector.broadcast %1 : vector<8x1xf32> to vector<8x256xf32>
    %3 = arith.mulf %0, %2 : vector<8x256xf32>
    %c0_3 = arith.constant 0 : index
    %c0_4 = arith.constant 0 : index
    %4 = vector.load %arg4[%c0_3, %c0_4] : memref<8x256xf32, #tpu.memory_space<vmem>>, vector<8x256xf32>
    tpu.vector_store %arg4[%c0_3, %c0_4], %3 {strides = array<i32>} : memref<8x256xf32, #tpu.memory_space<vmem>>, vector<8x256xf32>,
    return
  }
  func.func @transform_0(%arg0: i32, %arg1: i32) -> (i32, i32) {
    %c0_i32 = arith.constant 0 : i32
    %c0_i32_0 = arith.constant 0 : i32
    return %arg0, %c0_i32 : i32, i32
  }
  func.func @transform_1(%arg0: i32, %arg1: i32) -> (i32, i32) {
    %c0_i32 = arith.constant 0 : i32
    return %arg0, %arg1 : i32, i32
  }
  func.func @transform_2(%arg0: i32, %arg1: i32) -> (i32, i32) {
    %c0_i32 = arith.constant 0 : i32
    return %arg0, %arg1 : i32, i32
  }
}

</mosaic_0001>

<llo_original>
// kernel: tpu_custom_call.1
$region0: #{tpu_custom_call.1}
  #allocation0 [shape = 'u32[]', space=smem, size = 0x4, offset = 0x4, fixed_abs, tag = 'smem constant byte address 0x4 - core index']
  #allocation1 [shape = 'u32[72,128]{1,0:T(1,128)}', space=vmem, size = 0x9000, scoped, tag = 'internal scratch']
  %s0 = inlined_call_operand.vmem [shape: f32[8,1], index: 0, kind: input, shape index: {}]
  %s1 = inlined_call_operand.hbm [shape: f32[8,256], index: 1, kind: input, shape index: {}]
  %s2 = inlined_call_operand.hbm [shape: f32[8,256], index: 2, kind: output, shape index: {}]
  %s3 = sld [smem:[#allocation0]]
  $region22: #{tpu_custom_call.1} parent=0
    _
  %s5 = ssub.s32 1, %s3
  %s6 = scalar_select 0, %s5, %s3
  $region1: #{tpu_custom_call.1} parent=0
    #allocation2 [shape = 'u8[8192]{0}', space=vmem, size = 0x2000, scoped, tag = 'input window, operand 1, single buffered']
    #allocation3 [shape = 's32[1]{0}', space=sflag, size = 0x4, scoped, tag = 'scoped memory for tpu_custom_call.1']
    #allocation4 [shape = 's32[1]{0}', space=sflag, size = 0x4, scoped, tag = 'scoped memory for tpu_custom_call.1']
    #allocation5 [shape = 'u8[8192]{0}', space=vmem, size = 0x2000, scoped, tag = 'output window, operand 0, single buffered']
    %7 = vsyncpa [#allocation3], 0
    %8 = vsyncpa [#allocation4], 0
    // Predicated region
    $region2: #{tpu_custom_call.1} parent=1 // pred_check
      _
    $region3: #{tpu_custom_call.1} parent=1 // pred_check_branch
      %10 = sbr.rel (0) target = $region5
    $region4: #{tpu_custom_call.1} parent=1 // pred_region
      _
    $region5: #{tpu_custom_call.1} parent=1 // pred_fallthru
      _
    // Predicated region
    $region6: #{tpu_custom_call.1} parent=1 // pred_check
      _
    $region7: #{tpu_custom_call.1} parent=1 // pred_check_branch
      %12 = sbr.rel (0) target = $region9
    $region8: #{tpu_custom_call.1} parent=1 // pred_region
      %14 = vsyncadd [#allocation3], 0
      %s16 = sshll.u32 %s1, 4
      %s17 = int_to_ptr.hbm [resolvable:$true] %s16
      %s18 = sshll.u32 [#allocation2], 4
      %s19 = int_to_ptr.vmem [resolvable:$true] %s18
      %21 = dma.hbm_to_vmem [thread:$0]  %s17, 256, %s19, [#allocation3]
    $region9: #{tpu_custom_call.1} parent=1 // pred_fallthru
      _
    // Predicated region
    $region10: #{tpu_custom_call.1} parent=1 // pred_check
      _
    $region11: #{tpu_custom_call.1} parent=1 // pred_check_branch
      %23 = sbr.rel (0) target = $region13
    $region12: #{tpu_custom_call.1} parent=1 // pred_region
      %25 = dma.done [#allocation3], 256
    $region13: #{tpu_custom_call.1} parent=1 // pred_fallthru
      _
    %v26 = vld [vmem:[#allocation2] sm:$0xff]
    %v27 = vld [vmem:[#allocation2 + $0x8] sm:$0xff]
    %v28 = vld [vmem:[%s0] sm:$0xff]
    %30 = vset.pattern.permute.xlu0 0
    %31 = vperm.xlu0 %30, %v28
    %v32 = vpop.permute.xlu0 %31
    %v34 = vmul.f32 %v26, %v32
    %v35 = vmul.f32 %v27, %v32
    %36 = vst [vmem:[#allocation5] sm:$0xff] %v34
    %37 = vst [vmem:[#allocation5 + $0x8] sm:$0xff] %v35
    // Predicated region
    $region14: #{tpu_custom_call.1} parent=1 // pred_check
      _
    $region15: #{tpu_custom_call.1} parent=1 // pred_check_branch
      %39 = sbr.rel (0) target = $region17
    $region16: #{tpu_custom_call.1} parent=1 // pred_region
      %41 = vsyncadd [#allocation4], 0
      %s43 = sshll.u32 [#allocation5], 4
      %s44 = int_to_ptr.vmem [resolvable:$true] %s43
      %s45 = sshll.u32 %s2, 4
      %s46 = int_to_ptr.hbm [resolvable:$true] %s45
      %48 = dma.vmem_to_hbm [thread:$0]  %s44, 256, %s46, [#allocation4]
    $region17: #{tpu_custom_call.1} parent=1 // pred_fallthru
      _
    // Predicated region
    $region18: #{tpu_custom_call.1} parent=1 // pred_check
      _
    $region19: #{tpu_custom_call.1} parent=1 // pred_check_branch
      %50 = sbr.rel (0) target = $region21
    $region20: #{tpu_custom_call.1} parent=1 // pred_region
      %52 = dma.done [#allocation4], 256
    $region21: #{tpu_custom_call.1} parent=1 // pred_fallthru
      _
    %53 = vsyncpa [#allocation3], 1
    %54 = vsyncpa [#allocation4], 1

</llo_original>
